<compile_context>
chip_gen: v5e
topology: v5e:2x2
jax: 0.10.0
libtpu: 0.0.40
codegen_flags: <defaults>
</compile_context>

<pallas_src>
import functools

import jax
import jax.numpy as jnp
from jax.experimental import pallas as pl
from jax.experimental.pallas import tpu as pltpu


def _round_up(n, m):
    return (n + m - 1) // m * m


def mlp_kernel(x_ref,
               w_in_ref, b_in_ref,
               w1_ref, b1_ref,
               w2_ref, b2_ref,
               w_out_ref, b_out_ref,
               o_ref):
    """Fused 4-layer MLP + log_softmax for one batch tile.

    x tile is f32 or bf16, weights are bf16, biases f32.  Matmuls run in bf16
    with f32 accumulation; all elementwise math stays in f32.  Padded output
    lanes are already masked to -1e30 via the padded output bias.
    """
    x = x_ref[...].astype(jnp.bfloat16)   # no-op if x is already bf16

    # input layer + ReLU (f32 accumulate, f32 elementwise)
    h = jnp.dot(x, w_in_ref[...], preferred_element_type=jnp.float32)
    h = jnp.maximum(h + b_in_ref[...], 0.0)

    # hidden layer 1 + ReLU
    h1 = jnp.dot(h.astype(jnp.bfloat16), w1_ref[...],
                 preferred_element_type=jnp.float32)
    h1 = jnp.maximum(h1 + b1_ref[...], 0.0)

    # hidden layer 2 + ReLU
    h2 = jnp.dot(h1.astype(jnp.bfloat16), w2_ref[...],
                 preferred_element_type=jnp.float32)
    h2 = jnp.maximum(h2 + b2_ref[...], 0.0)

    # output layer; padded columns of w_out are zero and the corresponding
    # b_out entries are -1e30, so padded lanes come out masked for free.
    y = jnp.dot(h2.astype(jnp.bfloat16), w_out_ref[...],
                preferred_element_type=jnp.float32)
    y = y + b_out_ref[...]

    # log_softmax along dim=1 (numerically stable), full-width lane store.
    m = jnp.max(y, axis=1, keepdims=True)
    y_shift = y - m
    lse = jnp.log(jnp.sum(jnp.exp(y_shift), axis=1, keepdims=True))
    o_ref[...] = (y_shift - lse).astype(o_ref.dtype)


def prepare_params(params):
    """One-time pad + cast of the (in, out)-layout params.

    Weights -> bf16, padded to 128-multiples with zeros.
    Biases  -> f32, padded with zeros, EXCEPT b_out whose padded columns are
    set to -1e30 so padded output lanes never perturb log_softmax.
    Returns (padded_param_dict, (input_dim, hidden_dim, output_dim)).
    """
    input_dim, hidden_dim = params["w_in"].shape
    output_dim = params["w_out"].shape[1]

    d_in_p = _round_up(input_dim, 128)
    hid_p = _round_up(hidden_dim, 128)
    d_out_p = _round_up(output_dim, 128)

    f32, bf16 = jnp.float32, jnp.bfloat16

    def pad2(a, rows, cols, dtype, fill=0.0):
        base = jnp.full((rows, cols), fill, dtype)
        return base.at[:a.shape[0], :a.shape[1]].set(a.astype(dtype))

    padded = dict(
        w_in=pad2(params["w_in"], d_in_p, hid_p, bf16),
        b_in=pad2(params["b_in"], 1, hid_p, f32),
        w1=pad2(params["w1"], hid_p, hid_p, bf16),
        b1=pad2(params["b1"], 1, hid_p, f32),
        w2=pad2(params["w2"], hid_p, hid_p, bf16),
        b2=pad2(params["b2"], 1, hid_p, f32),
        w_out=pad2(params["w_out"], hid_p, d_out_p, bf16),
        # Baked-in output-lane mask: padded columns get -1e30 (kept in f32).
        b_out=pad2(params["b_out"], 1, d_out_p, f32, fill=-1e30),
    )
    return padded, (input_dim, hidden_dim, output_dim)


@functools.partial(jax.jit,
                   static_argnames=("output_dim", "max_tile", "out_dtype"))
def mlp_forward(x, padded_params, *, output_dim, max_tile=1024,
                out_dtype=jnp.float32):
    """x: (B, input_dim) f32 or bf16. padded_params: from prepare_params()."""
    B, input_dim = x.shape
    d_in_p = padded_params["w_in"].shape[0]
    hid_p = padded_params["w_in"].shape[1]
    d_out_p = padded_params["w_out"].shape[1]

    # Batch tile selection.  Small B: whole (16-row-rounded) batch in one grid
    # step.  Large B: tile at <= max_tile rows with an EVEN number of grid
    # steps so v7x's two TensorCores both get work along the parallel axis.
    b_p = _round_up(B, 16)
    if b_p <= max_tile:
        tm = b_p
        n_steps = 1
    else:
        n_steps = pl.cdiv(b_p, max_tile)
        if n_steps % 2:
            n_steps += 1
        tm = _round_up(pl.cdiv(b_p, n_steps), 16)
        b_p = n_steps * tm
    grid = (n_steps,)

    # Pad x in its incoming dtype (bf16 flows straight through to the MXU;
    # f32 is cast inside the kernel — no standalone wrapper-side cast).
    x_p = jnp.zeros((b_p, d_in_p), x.dtype).at[:B, :input_dim].set(x)

    # Weights/biases are small: keep them fully VMEM-resident every step.
    full = lambda shape: pl.BlockSpec(shape, lambda i: (0, 0))

    out_p = pl.pallas_call(
        mlp_kernel,
        out_shape=jax.ShapeDtypeStruct((b_p, d_out_p), out_dtype),
        grid_spec=pltpu.PrefetchScalarGridSpec(
            num_scalar_prefetch=0,
            grid=grid,
            in_specs=[
                pl.BlockSpec((tm, d_in_p), lambda i: (i, 0)),  # x tile
                full((d_in_p, hid_p)),                          # w_in (bf16)
                full((1, hid_p)),                               # b_in (f32)
                full((hid_p, hid_p)),                           # w1
                full((1, hid_p)),                               # b1
                full((hid_p, hid_p)),                           # w2
                full((1, hid_p)),                               # b2
                full((hid_p, d_out_p)),                         # w_out
                full((1, d_out_p)),                             # b_out (-1e30 pad)
            ],
            out_specs=pl.BlockSpec((tm, d_out_p), lambda i: (i, 0)),
        ),
        compiler_params=pltpu.CompilerParams(
            dimension_semantics=("parallel",)),
    )(x_p,
      padded_params["w_in"], padded_params["b_in"],
      padded_params["w1"], padded_params["b1"],
      padded_params["w2"], padded_params["b2"],
      padded_params["w_out"], padded_params["b_out"])

    return out_p[:B, :output_dim]


def init_params(key, input_dim, hidden_dim, output_dim):
    """Kaiming-uniform-ish init mimicking nn.Linear, stored as (in, out)."""
    ks = jax.random.split(key, 8)

    def lin(kw, kb, fan_in, fan_out):
        bound = 1.0 / jnp.sqrt(fan_in)
        w = jax.random.uniform(kw, (fan_in, fan_out), jnp.float32, -bound, bound)
        b = jax.random.uniform(kb, (1, fan_out), jnp.float32, -bound, bound)
        return w, b

    w_in, b_in = lin(ks[0], ks[1], input_dim, hidden_dim)
    w1, b1 = lin(ks[2], ks[3], hidden_dim, hidden_dim)
    w2, b2 = lin(ks[4], ks[5], hidden_dim, hidden_dim)
    w_out, b_out = lin(ks[6], ks[7], hidden_dim, output_dim)
    return dict(w_in=w_in, b_in=b_in, w1=w1, b1=b1,
                w2=w2, b2=b2, w_out=w_out, b_out=b_out)


def reference_forward_bf16(x, params):
    """Pure-JAX reference matching the kernel's bf16-matmul / f32-elementwise path."""
    bf16 = jnp.bfloat16

    def dot(a, w):
        return jnp.dot(a.astype(bf16), w.astype(bf16),
                       preferred_element_type=jnp.float32)

    h = jax.nn.relu(dot(x, params["w_in"]) + params["b_in"])
    h1 = jax.nn.relu(dot(h, params["w1"]) + params["b1"])
    h2 = jax.nn.relu(dot(h1, params["w2"]) + params["b2"])
    y = dot(h2, params["w_out"]) + params["b_out"]
    return jax.nn.log_softmax(y, axis=1)


def reference_forward_f32(x, params):
    """Full-precision reference matching the PyTorch forward (MNIST, no dropout)."""
    h = jax.nn.relu(x @ params["w_in"] + params["b_in"])
    h1 = jax.nn.relu(h @ params["w1"] + params["b1"])
    h2 = jax.nn.relu(h1 @ params["w2"] + params["b2"])
    y = h2 @ params["w_out"] + params["b_out"]
    return jax.nn.log_softmax(y, axis=1)


if __name__ == "__main__":
    # Small shapes: batch=16, input_dim=64, hidden_dim=128, output_dim=16.
    B, input_dim, hidden_dim, output_dim = 16, 64, 128, 16

    key = jax.random.PRNGKey(0)
    kx, kp = jax.random.split(key)

    # Input carries a singleton dim like an MNIST-style (B, 1, D) tensor;
    # torch.squeeze(x) in the reference removes it — done here in plain JAX glue.
    x_raw = jax.random.normal(kx, (B, 1, input_dim), jnp.float32)
    x = jnp.squeeze(x_raw)

    params = init_params(kp, input_dim, hidden_dim, output_dim)
    # One-time pad + bf16 cast (outside the per-call jitted forward).
    padded_params, (_, _, out_dim) = prepare_params(params)

    out = mlp_forward(x, padded_params, output_dim=out_dim)
    out = jax.block_until_ready(out)
    assert out.shape == (B, output_dim)

    # Match the bf16-matmul reference tightly, the f32 reference loosely.
    ref_bf16 = reference_forward_bf16(x, params)
    ref_f32 = reference_forward_f32(x, params)
    assert jnp.allclose(out, ref_bf16, atol=1e-3, rtol=1e-3), "mismatch vs bf16 reference"
    assert jnp.allclose(out, ref_f32, atol=1e-1, rtol=1e-1), "mismatch vs f32 reference"
    # Rows of log_softmax should sum (in prob space) to 1.
    assert jnp.allclose(jnp.sum(jnp.exp(out), axis=1), 1.0, atol=1e-4)

    # TODO(synk): Polarity variant (nn.Embedding input + y_pred[:, -1] slice) and
    # train-mode dropout are not implemented; only the MNIST/eval path is covered.
    print("KERNEL_OK")
</pallas_src>

<mosaic_0001>
module attributes {stable_mosaic.version = 11 : i64} {
  func.func @mlp_kernel(%arg0: i32, %arg1: memref<16x128xf32, #tpu.memory_space<vmem>>, %arg2: memref<128x128xbf16, #tpu.memory_space<vmem>>, %arg3: memref<1x128xf32, #tpu.memory_space<vmem>>, %arg4: memref<128x128xbf16, #tpu.memory_space<vmem>>, %arg5: memref<1x128xf32, #tpu.memory_space<vmem>>, %arg6: memref<128x128xbf16, #tpu.memory_space<vmem>>, %arg7: memref<1x128xf32, #tpu.memory_space<vmem>>, %arg8: memref<128x128xbf16, #tpu.memory_space<vmem>>, %arg9: memref<1x128xf32, #tpu.memory_space<vmem>>, %arg10: memref<16x128xf32, #tpu.memory_space<vmem>>) attributes {dimension_semantics = [#tpu.dimension_semantics<parallel>], iteration_bounds = array<i64: 1>, scalar_prefetch = 0 : i64, scratch_operands = 0 : i64, tpu.core_type = #tpu.core_type<tc>, window_params = [{transform_indices = @transform_0, window_bounds = array<i64: 16, 128>}, {pipeline_mode = #tpu.pipeline_mode<synchronous>, transform_indices = @transform_1, window_bounds = array<i64: 128, 128>}, {pipeline_mode = #tpu.pipeline_mode<synchronous>, transform_indices = @transform_2, window_bounds = array<i64: 1, 128>}, {pipeline_mode = #tpu.pipeline_mode<synchronous>, transform_indices = @transform_3, window_bounds = array<i64: 128, 128>}, {pipeline_mode = #tpu.pipeline_mode<synchronous>, transform_indices = @transform_4, window_bounds = array<i64: 1, 128>}, {pipeline_mode = #tpu.pipeline_mode<synchronous>, transform_indices = @transform_5, window_bounds = array<i64: 128, 128>}, {pipeline_mode = #tpu.pipeline_mode<synchronous>, transform_indices = @transform_6, window_bounds = array<i64: 1, 128>}, {pipeline_mode = #tpu.pipeline_mode<synchronous>, transform_indices = @transform_7, window_bounds = array<i64: 128, 128>}, {pipeline_mode = #tpu.pipeline_mode<synchronous>, transform_indices = @transform_8, window_bounds = array<i64: 1, 128>}, {transform_indices = @transform_9, window_bounds = array<i64: 16, 128>}]} {
    %c0 = arith.constant 0 : index
    %c0_0 = arith.constant 0 : index
    %0 = vector.load %arg1[%c0, %c0_0] : memref<16x128xf32, #tpu.memory_space<vmem>>, vector<16x128xf32>
    %1 = arith.truncf %0 : vector<16x128xf32> to vector<16x128xbf16>
    %c0_1 = arith.constant 0 : index
    %c0_2 = arith.constant 0 : index
    %2 = vector.load %arg2[%c0_1, %c0_2] : memref<128x128xbf16, #tpu.memory_space<vmem>>, vector<128x128xbf16>
    %cst = arith.constant dense<0.000000e+00> : vector<16x128xf32>
    %3 = tpu.matmul %1, %2, %cst {dimension_numbers = #tpu.dot_dimension_numbers<[1], [0], [0], [1], [0, 0, 1, 1], [], []>} : vector<16x128xbf16>, vector<128x128xbf16>, vector<16x128xf32> -> vector<16x128xf32>
    %c0_3 = arith.constant 0 : index
    %c0_4 = arith.constant 0 : index
    %4 = vector.load %arg3[%c0_3, %c0_4] : memref<1x128xf32, #tpu.memory_space<vmem>>, vector<1x128xf32>
    %5 = vector.broadcast %4 : vector<1x128xf32> to vector<16x128xf32>
    %6 = arith.addf %3, %5 : vector<16x128xf32>
    %cst_5 = arith.constant 0.000000e+00 : f32
    %7 = vector.broadcast %cst_5 : f32 to vector<16x128xf32>
    %8 = arith.maximumf %6, %7 : vector<16x128xf32>
    %9 = arith.truncf %8 : vector<16x128xf32> to vector<16x128xbf16>
    %c0_6 = arith.constant 0 : index
    %c0_7 = arith.constant 0 : index
    %10 = vector.load %arg4[%c0_6, %c0_7] : memref<128x128xbf16, #tpu.memory_space<vmem>>, vector<128x128xbf16>
    %cst_8 = arith.constant dense<0.000000e+00> : vector<16x128xf32>
    %11 = tpu.matmul %9, %10, %cst_8 {dimension_numbers = #tpu.dot_dimension_numbers<[1], [0], [0], [1], [0, 0, 1, 1], [], []>} : vector<16x128xbf16>, vector<128x128xbf16>, vector<16x128xf32> -> vector<16x128xf32>
    %c0_9 = arith.constant 0 : index
    %c0_10 = arith.constant 0 : index
    %12 = vector.load %arg5[%c0_9, %c0_10] : memref<1x128xf32, #tpu.memory_space<vmem>>, vector<1x128xf32>
    %13 = vector.broadcast %12 : vector<1x128xf32> to vector<16x128xf32>
    %14 = arith.addf %11, %13 : vector<16x128xf32>
    %cst_11 = arith.constant 0.000000e+00 : f32
    %15 = vector.broadcast %cst_11 : f32 to vector<16x128xf32>
    %16 = arith.maximumf %14, %15 : vector<16x128xf32>
    %17 = arith.truncf %16 : vector<16x128xf32> to vector<16x128xbf16>
    %c0_12 = arith.constant 0 : index
    %c0_13 = arith.constant 0 : index
    %18 = vector.load %arg6[%c0_12, %c0_13] : memref<128x128xbf16, #tpu.memory_space<vmem>>, vector<128x128xbf16>
    %cst_14 = arith.constant dense<0.000000e+00> : vector<16x128xf32>
    %19 = tpu.matmul %17, %18, %cst_14 {dimension_numbers = #tpu.dot_dimension_numbers<[1], [0], [0], [1], [0, 0, 1, 1], [], []>} : vector<16x128xbf16>, vector<128x128xbf16>, vector<16x128xf32> -> vector<16x128xf32>
    %c0_15 = arith.constant 0 : index
    %c0_16 = arith.constant 0 : index
    %20 = vector.load %arg7[%c0_15, %c0_16] : memref<1x128xf32, #tpu.memory_space<vmem>>, vector<1x128xf32>
    %21 = vector.broadcast %20 : vector<1x128xf32> to vector<16x128xf32>
    %22 = arith.addf %19, %21 : vector<16x128xf32>
    %cst_17 = arith.constant 0.000000e+00 : f32
    %23 = vector.broadcast %cst_17 : f32 to vector<16x128xf32>
    %24 = arith.maximumf %22, %23 : vector<16x128xf32>
    %25 = arith.truncf %24 : vector<16x128xf32> to vector<16x128xbf16>
    %c0_18 = arith.constant 0 : index
    %c0_19 = arith.constant 0 : index
    %26 = vector.load %arg8[%c0_18, %c0_19] : memref<128x128xbf16, #tpu.memory_space<vmem>>, vector<128x128xbf16>
    %cst_20 = arith.constant dense<0.000000e+00> : vector<16x128xf32>
    %27 = tpu.matmul %25, %26, %cst_20 {dimension_numbers = #tpu.dot_dimension_numbers<[1], [0], [0], [1], [0, 0, 1, 1], [], []>} : vector<16x128xbf16>, vector<128x128xbf16>, vector<16x128xf32> -> vector<16x128xf32>
    %c0_21 = arith.constant 0 : index
    %c0_22 = arith.constant 0 : index
    %28 = vector.load %arg9[%c0_21, %c0_22] : memref<1x128xf32, #tpu.memory_space<vmem>>, vector<1x128xf32>
    %29 = vector.broadcast %28 : vector<1x128xf32> to vector<16x128xf32>
    %30 = arith.addf %27, %29 : vector<16x128xf32>
    %cst_23 = arith.constant dense<0xFF800000> : vector<16xf32>
    %31 = vector.multi_reduction <maximumf>, %30, %cst_23 [1] : vector<16x128xf32> to vector<16xf32>
    %32 = vector.shape_cast %31 : vector<16xf32> to vector<16x1xf32>
    %33 = vector.broadcast %32 : vector<16x1xf32> to vector<16x128xf32>
    %34 = arith.subf %30, %33 : vector<16x128xf32>
    %35 = math.exp %34 : vector<16x128xf32>
    %cst_24 = arith.constant dense<0.000000e+00> : vector<16xf32>
    %36 = vector.multi_reduction <add>, %35, %cst_24 [1] : vector<16x128xf32> to vector<16xf32>
    %37 = vector.shape_cast %36 : vector<16xf32> to vector<16x1xf32>
    %38 = math.log %37 : vector<16x1xf32>
    %39 = vector.broadcast %38 : vector<16x1xf32> to vector<16x128xf32>
    %40 = arith.subf %34, %39 : vector<16x128xf32>
    %c0_25 = arith.constant 0 : index
    %c0_26 = arith.constant 0 : index
    %41 = vector.load %arg10[%c0_25, %c0_26] : memref<16x128xf32, #tpu.memory_space<vmem>>, vector<16x128xf32>
    tpu.vector_store %arg10[%c0_25, %c0_26], %40 {strides = array<i32>} : memref<16x128xf32, #tpu.memory_space<vmem>>, vector<16x128xf32>,
    return
  }
  func.func @transform_0(%arg0: i32) -> (i32, i32) {
    %c0_i32 = arith.constant 0 : i32
    %c0_i32_0 = arith.constant 0 : i32
    return %arg0, %c0_i32 : i32, i32
  }
  func.func @transform_1(%arg0: i32) -> (i32, i32) {
    %c0_i32 = arith.constant 0 : i32
    %c0_i32_0 = arith.constant 0 : i32
    %c0_i32_1 = arith.constant 0 : i32
    return %c0_i32, %c0_i32_0 : i32, i32
  }
  func.func @transform_2(%arg0: i32) -> (i32, i32) {
    %c0_i32 = arith.constant 0 : i32
    %c0_i32_0 = arith.constant 0 : i32
    %c0_i32_1 = arith.constant 0 : i32
    return %c0_i32, %c0_i32_0 : i32, i32
  }
  func.func @transform_3(%arg0: i32) -> (i32, i32) {
    %c0_i32 = arith.constant 0 : i32
    %c0_i32_0 = arith.constant 0 : i32
    %c0_i32_1 = arith.constant 0 : i32
    return %c0_i32, %c0_i32_0 : i32, i32
  }
  func.func @transform_4(%arg0: i32) -> (i32, i32) {
    %c0_i32 = arith.constant 0 : i32
    %c0_i32_0 = arith.constant 0 : i32
    %c0_i32_1 = arith.constant 0 : i32
    return %c0_i32, %c0_i32_0 : i32, i32
  }
  func.func @transform_5(%arg0: i32) -> (i32, i32) {
    %c0_i32 = arith.constant 0 : i32
    %c0_i32_0 = arith.constant 0 : i32
    %c0_i32_1 = arith.constant 0 : i32
    return %c0_i32, %c0_i32_0 : i32, i32
  }
  func.func @transform_6(%arg0: i32) -> (i32, i32) {
    %c0_i32 = arith.constant 0 : i32
    %c0_i32_0 = arith.constant 0 : i32
    %c0_i32_1 = arith.constant 0 : i32
    return %c0_i32, %c0_i32_0 : i32, i32
  }
  func.func @transform_7(%arg0: i32) -> (i32, i32) {
    %c0_i32 = arith.constant 0 : i32
    %c0_i32_0 = arith.constant 0 : i32
    %c0_i32_1 = arith.constant 0 : i32
    return %c0_i32, %c0_i32_0 : i32, i32
  }
  func.func @transform_8(%arg0: i32) -> (i32, i32) {
    %c0_i32 = arith.constant 0 : i32
    %c0_i32_0 = arith.constant 0 : i32
    %c0_i32_1 = arith.constant 0 : i32
    return %c0_i32, %c0_i32_0 : i32, i32
  }
  func.func @transform_9(%arg0: i32) -> (i32, i32) {
    %c0_i32 = arith.constant 0 : i32
    %c0_i32_0 = arith.constant 0 : i32
    return %arg0, %c0_i32 : i32, i32
  }
}

</mosaic_0001>

<llo_original>
// kernel: mlp_forward.1
$region0: #{mlp_forward.1}
  #allocation0 [shape = 'u32[]', space=smem, size = 0x4, offset = 0x4, fixed_abs, tag = 'smem constant byte address 0x4 - core index']
  #allocation1 [shape = 'u32[72,128]{1,0:T(1,128)}', space=vmem, size = 0x9000, scoped, tag = 'internal scratch']
  %s0 = inlined_call_operand.vmem [shape: f32[16,128], index: 0, kind: input, shape index: {}]
  %s1 = inlined_call_operand.vmem [shape: bf16[128,128], index: 1, kind: input, shape index: {}]
  %s2 = inlined_call_operand.vmem [shape: f32[1,128], index: 2, kind: input, shape index: {}]
  %s3 = inlined_call_operand.hbm [shape: bf16[128,128], index: 3, kind: input, shape index: {}]
  %s4 = inlined_call_operand.vmem [shape: f32[1,128], index: 4, kind: input, shape index: {}]
  %s5 = inlined_call_operand.hbm [shape: bf16[128,128], index: 5, kind: input, shape index: {}]
  %s6 = inlined_call_operand.vmem [shape: f32[1,128], index: 6, kind: input, shape index: {}]
  %s7 = inlined_call_operand.hbm [shape: bf16[128,128], index: 7, kind: input, shape index: {}]
  %s8 = inlined_call_operand.vmem [shape: f32[1,128], index: 8, kind: input, shape index: {}]
  %s9 = inlined_call_operand.hbm [shape: f32[16,128], index: 9, kind: output, shape index: {}]
  %s10 = sld [smem:[#allocation0]]
  $region58: #{mlp_forward.1} parent=0
    _
  %s12 = ssub.s32 1, %s10
  %s13 = scalar_select 0, %s12, %s10
  $region1: #{mlp_forward.1} parent=0
    #allocation2 [shape = 'u8[32768]{0}', space=vmem, size = 0x8000, scoped, tag = 'input window, operand 3, single buffered']
    #allocation3 [shape = 's32[1]{0}', space=sflag, size = 0x4, scoped, tag = 'scoped memory for mlp_forward.1']
    #allocation4 [shape = 's32[1]{0}', space=sflag, size = 0x4, scoped, tag = 'scoped memory for mlp_forward.1']
    #allocation5 [shape = 'u8[32768]{0}', space=vmem, size = 0x8000, scoped, tag = 'input window, operand 5, single buffered']
    #allocation6 [shape = 's32[1]{0}', space=sflag, size = 0x4, scoped, tag = 'scoped memory for mlp_forward.1']
    #allocation7 [shape = 'u8[32768]{0}', space=vmem, size = 0x8000, scoped, tag = 'input window, operand 7, single buffered']
    #allocation8 [shape = 'u8[8192]{0}', space=vmem, size = 0x2000, scoped, tag = 'output window, operand 0, single buffered']
    %14 = vsyncpa [#allocation3], 0
    %15 = vsyncpa [#allocation6], 0
    %16 = vsyncpa [#allocation4], 0
    // Predicated region
    $region2: #{mlp_forward.1} parent=1 // pred_check
      _
    $region3: #{mlp_forward.1} parent=1 // pred_check_branch
      %18 = sbr.rel (0) target = $region5
    $region4: #{mlp_forward.1} parent=1 // pred_region
      _
    $region5: #{mlp_forward.1} parent=1 // pred_fallthru
      _
    // Predicated region
    $region6: #{mlp_forward.1} parent=1 // pred_check
      _
    $region7: #{mlp_forward.1} parent=1 // pred_check_branch
      %20 = sbr.rel (0) target = $region9
    $region8: #{mlp_forward.1} parent=1 // pred_region
      _
    $region9: #{mlp_forward.1} parent=1 // pred_fallthru
      _
    // Predicated region
    $region10: #{mlp_forward.1} parent=1 // pred_check
      _
    $region11: #{mlp_forward.1} parent=1 // pred_check_branch
      %22 = sbr.rel (0) target = $region13
    $region12: #{mlp_forward.1} parent=1 // pred_region
      _
    $region13: #{mlp_forward.1} parent=1 // pred_fallthru
      _
    // Predicated region
    $region14: #{mlp_forward.1} parent=1 // pred_check
      _
    $region15: #{mlp_forward.1} parent=1 // pred_check_branch
      %24 = sbr.rel (0) target = $region17
    $region16: #{mlp_forward.1} parent=1 // pred_region
      %26 = vsyncadd [#allocation3], 0
      %s27 = sshll.u32 %s3, 4
      %s28 = int_to_ptr.hbm [resolvable:$true] %s27
      %s29 = sshll.u32 [#allocation2], 4
      %s30 = int_to_ptr.vmem [resolvable:$true] %s29
      %35 = dma.hbm_to_vmem [thread:$0]  %s28, 1024, %s30, [#allocation3], 64, 64, 4
    $region17: #{mlp_forward.1} parent=1 // pred_fallthru
      _
    // Predicated region
    $region18: #{mlp_forward.1} parent=1 // pred_check
      _
    $region19: #{mlp_forward.1} parent=1 // pred_check_branch
      %37 = sbr.rel (0) target = $region21
    $region20: #{mlp_forward.1} parent=1 // pred_region
      _
    $region21: #{mlp_forward.1} parent=1 // pred_fallthru
      _
    // Predicated region
    $region22: #{mlp_forward.1} parent=1 // pred_check
      _
    $region23: #{mlp_forward.1} parent=1 // pred_check_branch
      %39 = sbr.rel (0) target = $region25
    $region24: #{mlp_forward.1} parent=1 // pred_region
      %41 = vsyncadd [#allocation6], 0
      %s42 = sshll.u32 %s5, 4
      %s43 = int_to_ptr.hbm [resolvable:$true] %s42
      %s44 = sshll.u32 [#allocation5], 4
      %s45 = int_to_ptr.vmem [resolvable:$true] %s44
      %50 = dma.hbm_to_vmem [thread:$0]  %s43, 1024, %s45, [#allocation6], 64, 64, 4
    $region25: #{mlp_forward.1} parent=1 // pred_fallthru
      _
    // Predicated region
    $region26: #{mlp_forward.1} parent=1 // pred_check
      _
    $region27: #{mlp_forward.1} parent=1 // pred_check_branch
      %52 = sbr.rel (0) target = $region29
    $region28: #{mlp_forward.1} parent=1 // pred_region
      _
    $region29: #{mlp_forward.1} parent=1 // pred_fallthru
      _
    // Predicated region
    $region30: #{mlp_forward.1} parent=1 // pred_check
      _
    $region31: #{mlp_forward.1} parent=1 // pred_check_branch
      %54 = sbr.rel (0) target = $region33
    $region32: #{mlp_forward.1} parent=1 // pred_region
      %56 = vsyncadd [#allocation6], 0
      %s57 = sshll.u32 %s7, 4
      %s58 = int_to_ptr.hbm [resolvable:$true] %s57
      %s59 = sshll.u32 [#allocation7], 4
      %s60 = int_to_ptr.vmem [resolvable:$true] %s59
      %65 = dma.hbm_to_vmem [thread:$0]  %s58, 1024, %s60, [#allocation6], 64, 64, 4
    $region33: #{mlp_forward.1} parent=1 // pred_fallthru
      _
    // Predicated region
    $region34: #{mlp_forward.1} parent=1 // pred_check
      _
    $region35: #{mlp_forward.1} parent=1 // pred_check_branch
      %67 = sbr.rel (0) target = $region37
    $region36: #{mlp_forward.1} parent=1 // pred_region
      _
    $region37: #{mlp_forward.1} parent=1 // pred_fallthru
      _
    // Predicated region
    $region38: #{mlp_forward.1} parent=1 // pred_check
      _
    $region39: #{mlp_forward.1} parent=1 // pred_check_branch
      %69 = sbr.rel (0) target = $region41
    $region40: #{mlp_forward.1} parent=1 // pred_region
      %71 = dma.done [#allocation3], 1024
    $region41: #{mlp_forward.1} parent=1 // pred_fallthru
      _
    // Predicated region
    $region42: #{mlp_forward.1} parent=1 // pred_check
      _
    $region43: #{mlp_forward.1} parent=1 // pred_check_branch
      %73 = sbr.rel (0) target = $region45
    $region44: #{mlp_forward.1} parent=1 // pred_region
      %75 = dma.done [#allocation6], 1024
    $region45: #{mlp_forward.1} parent=1 // pred_fallthru
      _
    // Predicated region
    $region46: #{mlp_forward.1} parent=1 // pred_check
      _
    $region47: #{mlp_forward.1} parent=1 // pred_check_branch
      %77 = sbr.rel (0) target = $region49
    $region48: #{mlp_forward.1} parent=1 // pred_region
      %79 = dma.done [#allocation6], 1024
    $region49: #{mlp_forward.1} parent=1 // pred_fallthru
      _
    %v80 = vld [vmem:[%s0] sm:$0xff]
    %v81 = vld [vmem:[%s0 + $0x8] sm:$0xff]
    %v82 = vpack.c.bf16 %v81, %v80
    %v83 = vld [vmem:[%s1] sm:$0xf]
    %v84 = vld [vmem:[%s1 + $0x4] sm:$0xf]
    %v85 = vld [vmem:[%s1 + $0x8] sm:$0xf]
    %v86 = vld [vmem:[%s1 + $0xc] sm:$0xf]
    %v87 = vld [vmem:[%s1 + $0x10] sm:$0xf]
    %v88 = vld [vmem:[%s1 + $0x14] sm:$0xf]
    %v89 = vld [vmem:[%s1 + $0x18] sm:$0xf]
    %v90 = vld [vmem:[%s1 + $0x1c] sm:$0xf]
    %v91 = vld [vmem:[%s1 + $0x20] sm:$0xf]
    %v92 = vld [vmem:[%s1 + $0x24] sm:$0xf]
    %v93 = vld [vmem:[%s1 + $0x28] sm:$0xf]
    %v94 = vld [vmem:[%s1 + $0x2c] sm:$0xf]
    %v95 = vld [vmem:[%s1 + $0x30] sm:$0xf]
    %v96 = vld [vmem:[%s1 + $0x34] sm:$0xf]
    %v97 = vld [vmem:[%s1 + $0x38] sm:$0xf]
    %v98 = vld [vmem:[%s1 + $0x3c] sm:$0xf]
    %v99 = vld [vmem:[%s2] sm:$0x1]
    %v101 = vperm.slane %v99, 0
    %v119 = vunpack.c.l.b16 %v83
    %v120 = vunpack.c.l.b16 %v84
    %v121 = vunpack.c.l.b16 %v85
    %v122 = vunpack.c.l.b16 %v86
    %v123 = vunpack.c.l.b16 %v87
    %v124 = vunpack.c.l.b16 %v88
    %v125 = vunpack.c.l.b16 %v89
    %v126 = vunpack.c.l.b16 %v90
    %v127 = vunpack.c.l.b16 %v91
    %v128 = vunpack.c.l.b16 %v92
    %v129 = vunpack.c.l.b16 %v93
    %v130 = vunpack.c.l.b16 %v94
    %v131 = vunpack.c.l.b16 %v95
    %v132 = vunpack.c.l.b16 %v96
    %v133 = vunpack.c.l.b16 %v97
    %v134 = vunpack.c.l.b16 %v98
    %v135 = vpack.c.b16 %v120, %v119
    %v136 = vpack.c.b16 %v122, %v121
    %v137 = vpack.c.b16 %v124, %v123
    %v138 = vpack.c.b16 %v126, %v125
    %v139 = vpack.c.b16 %v128, %v127
    %v140 = vpack.c.b16 %v130, %v129
    %v141 = vpack.c.b16 %v132, %v131
    %v142 = vpack.c.b16 %v134, %v133
    %151 = vmatpush.bf16.msra.mxu0 %v142
    %152 = vmatpush.bf16.msra.mxu0 %v141
    %153 = vmatpush.bf16.msra.mxu0 %v140
    %154 = vmatpush.bf16.msra.mxu0 %v139
    %155 = vmatpush.bf16.msra.mxu0 %v138
    %156 = vmatpush.bf16.msra.mxu0 %v137
    %157 = vmatpush.bf16.msra.mxu0 %v136
    %158 = vmatpush.bf16.msra.mxu0 %v135
    %159 = vmatmul.bf16.gmra.mxu0 %v82
    %v160 = vpop.f32.mrf.mxu0
    %v161 = vadd.f32 %v101, %v160
    %v162 = vpop.f32.mrf.mxu0
    %v163 = vadd.f32 %v101, %v162
    %164 = vdwg.mxu0
    %v165 = vmax.f32 %v161, 0.0
    %v166 = vmax.f32 %v163, 0.0
    %v167 = vpack.c.bf16 %v166, %v165
    %v168 = vld [vmem:[#allocation2] sm:$0xf]
    %v169 = vld [vmem:[#allocation2 + $0x4] sm:$0xf]
    %v170 = vld [vmem:[#allocation2 + $0x8] sm:$0xf]
    %v171 = vld [vmem:[#allocation2 + $0xc] sm:$0xf]
    %v172 = vld [vmem:[#allocation2 + $0x10] sm:$0xf]
    %v173 = vld [vmem:[#allocation2 + $0x14] sm:$0xf]
    %v174 = vld [vmem:[#allocation2 + $0x18] sm:$0xf]
    %v175 = vld [vmem:[#allocation2 + $0x1c] sm:$0xf]
    %v176 = vld [vmem:[#allocation2 + $0x20] sm:$0xf]
    %v177 = vld [vmem:[#allocation2 + $0x24] sm:$0xf]
    %v178 = vld [vmem:[#allocation2 + $0x28] sm:$0xf]
    %v179 = vld [vmem:[#allocation2 + $0x2c] sm:$0xf]
    %v180 = vld [vmem:[#allocation2 + $0x30] sm:$0xf]
    %v181 = vld [vmem:[#allocation2 + $0x34] sm:$0xf]
    %v182 = vld [vmem:[#allocation2 + $0x38] sm:$0xf]
    %v183 = vld [vmem:[#allocation2 + $0x3c] sm:$0xf]
    %v184 = vld [vmem:[%s4] sm:$0x1]
    %v186 = vperm.slane %v184, 0
    %v204 = vunpack.c.l.b16 %v168
    %v205 = vunpack.c.l.b16 %v169
    %v206 = vunpack.c.l.b16 %v170
    %v207 = vunpack.c.l.b16 %v171
    %v208 = vunpack.c.l.b16 %v172
    %v209 = vunpack.c.l.b16 %v173
    %v210 = vunpack.c.l.b16 %v174
    %v211 = vunpack.c.l.b16 %v175
    %v212 = vunpack.c.l.b16 %v176
    %v213 = vunpack.c.l.b16 %v177
    %v214 = vunpack.c.l.b16 %v178
    %v215 = vunpack.c.l.b16 %v179
    %v216 = vunpack.c.l.b16 %v180
    %v217 = vunpack.c.l.b16 %v181
    %v218 = vunpack.c.l.b16 %v182
    %v219 = vunpack.c.l.b16 %v183
    %v220 = vpack.c.b16 %v205, %v204
    %v221 = vpack.c.b16 %v207, %v206
    %v222 = vpack.c.b16 %v209, %v208
    %v223 = vpack.c.b16 %v211, %v210
    %v224 = vpack.c.b16 %v213, %v212
    %v225 = vpack.c.b16 %v215, %v214
    %v226 = vpack.c.b16 %v217, %v216
    %v227 = vpack.c.b16 %v219, %v218
    %236 = vmatpush.bf16.msra.mxu0 %v227
    %237 = vmatpush.bf16.msra.mxu0 %v226
    %238 = vmatpush.bf16.msra.mxu0 %v225
    %239 = vmatpush.bf16.msra.mxu0 %v224
    %240 = vmatpush.bf16.msra.mxu0 %v223
    %241 = vmatpush.bf16.msra.mxu0 %v222
    %242 = vmatpush.bf16.msra.mxu0 %v221
    %243 = vmatpush.bf16.msra.mxu0 %v220
    %244 = vmatmul.bf16.gmra.mxu0 %v167
    %v245 = vpop.f32.mrf.mxu0
    %v246 = vadd.f32 %v186, %v245
    %v247 = vpop.f32.mrf.mxu0
    %v248 = vadd.f32 %v186, %v247
    %249 = vdwg.mxu0
    %v250 = vmax.f32 %v246, 0.0
    %v251 = vmax.f32 %v248, 0.0
    %v252 = vpack.c.bf16 %v251, %v250
    %v253 = vld [vmem:[#allocation5] sm:$0xf]
    %v254 = vld [vmem:[#allocation5 + $0x4] sm:$0xf]
    %v255 = vld [vmem:[#allocation5 + $0x8] sm:$0xf]
    %v256 = vld [vmem:[#allocation5 + $0xc] sm:$0xf]
    %v257 = vld [vmem:[#allocation5 + $0x10] sm:$0xf]
    %v258 = vld [vmem:[#allocation5 + $0x14] sm:$0xf]
    %v259 = vld [vmem:[#allocation5 + $0x18] sm:$0xf]
    %v260 = vld [vmem:[#allocation5 + $0x1c] sm:$0xf]
    %v261 = vld [vmem:[#allocation5 + $0x20] sm:$0xf]
    %v262 = vld [vmem:[#allocation5 + $0x24] sm:$0xf]
    %v263 = vld [vmem:[#allocation5 + $0x28] sm:$0xf]
    %v264 = vld [vmem:[#allocation5 + $0x2c] sm:$0xf]
    %v265 = vld [vmem:[#allocation5 + $0x30] sm:$0xf]
    %v266 = vld [vmem:[#allocation5 + $0x34] sm:$0xf]
    %v267 = vld [vmem:[#allocation5 + $0x38] sm:$0xf]
    %v268 = vld [vmem:[#allocation5 + $0x3c] sm:$0xf]
    %v269 = vld [vmem:[%s6] sm:$0x1]
    %v271 = vperm.slane %v269, 0
    %v289 = vunpack.c.l.b16 %v253
    %v290 = vunpack.c.l.b16 %v254
    %v291 = vunpack.c.l.b16 %v255
    %v292 = vunpack.c.l.b16 %v256
    %v293 = vunpack.c.l.b16 %v257
    %v294 = vunpack.c.l.b16 %v258
    %v295 = vunpack.c.l.b16 %v259
    %v296 = vunpack.c.l.b16 %v260
    %v297 = vunpack.c.l.b16 %v261
    %v298 = vunpack.c.l.b16 %v262
    %v299 = vunpack.c.l.b16 %v263
    %v300 = vunpack.c.l.b16 %v264
    %v301 = vunpack.c.l.b16 %v265
    %v302 = vunpack.c.l.b16 %v266
    %v303 = vunpack.c.l.b16 %v267
    %v304 = vunpack.c.l.b16 %v268
    %v305 = vpack.c.b16 %v290, %v289
    %v306 = vpack.c.b16 %v292, %v291
    %v307 = vpack.c.b16 %v294, %v293
    %v308 = vpack.c.b16 %v296, %v295
    %v309 = vpack.c.b16 %v298, %v297
    %v310 = vpack.c.b16 %v300, %v299
    %v311 = vpack.c.b16 %v302, %v301
    %v312 = vpack.c.b16 %v304, %v303
    %321 = vmatpush.bf16.msra.mxu0 %v312
    %322 = vmatpush.bf16.msra.mxu0 %v311
    %323 = vmatpush.bf16.msra.mxu0 %v310
    %324 = vmatpush.bf16.msra.mxu0 %v309
    %325 = vmatpush.bf16.msra.mxu0 %v308
    %326 = vmatpush.bf16.msra.mxu0 %v307
    %327 = vmatpush.bf16.msra.mxu0 %v306
    %328 = vmatpush.bf16.msra.mxu0 %v305
    %329 = vmatmul.bf16.gmra.mxu0 %v252
    %v330 = vpop.f32.mrf.mxu0
    %v331 = vadd.f32 %v271, %v330
    %v332 = vpop.f32.mrf.mxu0
    %v333 = vadd.f32 %v271, %v332
    %334 = vdwg.mxu0
    %v335 = vmax.f32 %v331, 0.0
    %v336 = vmax.f32 %v333, 0.0
    %v337 = vpack.c.bf16 %v336, %v335
    %v338 = vld [vmem:[#allocation7] sm:$0xf]
    %v339 = vld [vmem:[#allocation7 + $0x4] sm:$0xf]
    %v340 = vld [vmem:[#allocation7 + $0x8] sm:$0xf]
    %v341 = vld [vmem:[#allocation7 + $0xc] sm:$0xf]
    %v342 = vld [vmem:[#allocation7 + $0x10] sm:$0xf]
    %v343 = vld [vmem:[#allocation7 + $0x14] sm:$0xf]
    %v344 = vld [vmem:[#allocation7 + $0x18] sm:$0xf]
    %v345 = vld [vmem:[#allocation7 + $0x1c] sm:$0xf]
    %v346 = vld [vmem:[#allocation7 + $0x20] sm:$0xf]
    %v347 = vld [vmem:[#allocation7 + $0x24] sm:$0xf]
    %v348 = vld [vmem:[#allocation7 + $0x28] sm:$0xf]
    %v349 = vld [vmem:[#allocation7 + $0x2c] sm:$0xf]
    %v350 = vld [vmem:[#allocation7 + $0x30] sm:$0xf]
    %v351 = vld [vmem:[#allocation7 + $0x34] sm:$0xf]
    %v352 = vld [vmem:[#allocation7 + $0x38] sm:$0xf]
    %v353 = vld [vmem:[#allocation7 + $0x3c] sm:$0xf]
    %v354 = vld [vmem:[%s8] sm:$0x1]
    %v356 = vperm.slane %v354, 0
    %v374 = vunpack.c.l.b16 %v338
    %v375 = vunpack.c.l.b16 %v339
    %v376 = vunpack.c.l.b16 %v340
    %v377 = vunpack.c.l.b16 %v341
    %v378 = vunpack.c.l.b16 %v342
    %v379 = vunpack.c.l.b16 %v343
    %v380 = vunpack.c.l.b16 %v344
    %v381 = vunpack.c.l.b16 %v345
    %v382 = vunpack.c.l.b16 %v346
    %v383 = vunpack.c.l.b16 %v347
    %v384 = vunpack.c.l.b16 %v348
    %v385 = vunpack.c.l.b16 %v349
    %v386 = vunpack.c.l.b16 %v350
    %v387 = vunpack.c.l.b16 %v351
    %v388 = vunpack.c.l.b16 %v352
    %v389 = vunpack.c.l.b16 %v353
    %v390 = vpack.c.b16 %v375, %v374
    %v391 = vpack.c.b16 %v377, %v376
    %v392 = vpack.c.b16 %v379, %v378
    %v393 = vpack.c.b16 %v381, %v380
    %v394 = vpack.c.b16 %v383, %v382
    %v395 = vpack.c.b16 %v385, %v384
    %v396 = vpack.c.b16 %v387, %v386
    %v397 = vpack.c.b16 %v389, %v388
    %406 = vmatpush.bf16.msra.mxu0 %v397
    %407 = vmatpush.bf16.msra.mxu0 %v396
    %408 = vmatpush.bf16.msra.mxu0 %v395
    %409 = vmatpush.bf16.msra.mxu0 %v394
    %410 = vmatpush.bf16.msra.mxu0 %v393
    %411 = vmatpush.bf16.msra.mxu0 %v392
    %412 = vmatpush.bf16.msra.mxu0 %v391
    %413 = vmatpush.bf16.msra.mxu0 %v390
    %414 = vmatmul.bf16.gmra.mxu0 %v337
    %v415 = vpop.f32.mrf.mxu0
    %v416 = vadd.f32 %v356, %v415
    %v417 = vpop.f32.mrf.mxu0
    %v418 = vadd.f32 %v356, %v417
    %419 = vdwg.mxu0
    %420 = vmax.xlane.f32.xlu0 %v416
    %v421 = vpop.xlane.xlu0 %420
    %422 = vmax.xlane.f32.xlu0 %v418
    %v423 = vpop.xlane.xlu0 %422
    %v424 = vsub.f32 %v416, %v421
    %v425 = vsub.f32 %v418, %v423
    %v426 = vmul.f32 %v424, 1.442695
    %v427 = vpow.pop %v426
    %v428 = vmul.f32 %v425, 1.442695
    %v429 = vpow.pop %v428
    %430 = vadd.xlane.f32.xlu0 %v427
    %v431 = vpop.xlane.xlu0 %430
    %432 = vadd.xlane.f32.xlu0 %v429
    %v433 = vpop.xlane.xlu0 %432
    %v434 = vlog2.pop %v431
    %v435 = vmul.f32 %v434, 0.6931472
    %v436 = vlog2.pop %v433
    %v437 = vmul.f32 %v436, 0.6931472
    %v438 = vsub.f32 %v424, %v435
    %v439 = vsub.f32 %v425, %v437
    %440 = vst [vmem:[#allocation8] sm:$0xff] %v438
    %441 = vst [vmem:[#allocation8 + $0x8] sm:$0xff] %v439
    // Predicated region
    $region50: #{mlp_forward.1} parent=1 // pred_check
      _
    $region51: #{mlp_forward.1} parent=1 // pred_check_branch
      %443 = sbr.rel (0) target = $region53
    $region52: #{mlp_forward.1} parent=1 // pred_region
      %445 = vsyncadd [#allocation4], 0
      %s446 = sshll.u32 [#allocation8], 4
      %s447 = int_to_ptr.vmem [resolvable:$true] %s446
      %s448 = sshll.u32 %s9, 4
      %s449 = int_to_ptr.hbm [resolvable:$true] %s448
      %454 = dma.vmem_to_hbm [thread:$0]  %s447, 256, %s449, [#allocation4], 128, 128, 8
    $region53: #{mlp_forward.1} parent=1 // pred_fallthru
      _
    // Predicated region
    $region54: #{mlp_forward.1} parent=1 // pred_check
      _
    $region55: #{mlp_forward.1} parent=1 // pred_check_branch
      %456 = sbr.rel (0) target = $region57
    $region56: #{mlp_forward.1} parent=1 // pred_region
      %458 = dma.done [#allocation4], 256
    $region57: #{mlp_forward.1} parent=1 // pred_fallthru
      _
    %459 = vsyncpa [#allocation3], 1
    %460 = vsyncpa [#allocation6], 1
    %461 = vsyncpa [#allocation4], 1

</llo_original>
